<compile_context>
chip_gen: v5e
topology: v5e:2x2
jax: 0.10.0
libtpu: 0.0.40
codegen_flags: <defaults>
</compile_context>

<pallas_src>
import jax
import jax.numpy as jnp
from jax import lax
from jax.experimental import pallas as pl
from jax.experimental.pallas import tpu as pltpu

LOG_SIG_MAX = 2.0
LOG_SIG_MIN = -5.0


def _rup(x, m):
    return -(-x // m) * m


# ------------------------------ kernel body ------------------------------

def _make_kernel(h_pad, num_actions, c_out):
    """Kernel closure with all sizes baked in statically."""
    A = num_actions

    def kernel(state_ref, ws_ref, wx_ref, wh_ref, b_ref, out_ref):
        s16 = state_ref[...].astype(jnp.bfloat16)                 # (TB, N_in)

        # One packed dot: layer-1 pre-activation + state contribs for layers 2-4.
        sc = jnp.dot(s16, ws_ref[...],
                     preferred_element_type=jnp.float32)          # (TB, 4*H_pad)

        # Layer 1.
        x = jnp.maximum(sc[:, 0:h_pad] + b_ref[0:1, 0:h_pad], 0.0)

        # Layers 2..4: relu(x @ Wx_i + s_contrib_i + b_i), one dot each.
        for li in range(3):
            xw = jnp.dot(x.astype(jnp.bfloat16),
                         wx_ref[li * h_pad:(li + 1) * h_pad, :],
                         preferred_element_type=jnp.float32)
            x = jnp.maximum(
                xw
                + sc[:, (li + 1) * h_pad:(li + 2) * h_pad]
                + b_ref[0:1, (li + 1) * h_pad:(li + 2) * h_pad], 0.0)

        # Fused heads: one (H_pad, 128) dot; clamp only the log_std lanes.
        y = jnp.dot(x.astype(jnp.bfloat16), wh_ref[...],
                    preferred_element_type=jnp.float32)           # (TB, c_out)
        y = y + b_ref[1:2, 0:c_out]
        col = lax.broadcasted_iota(jnp.int32, y.shape, 1)
        is_log_std = (col >= A) & (col < 2 * A)
        y = jnp.where(is_log_std, jnp.clip(y, LOG_SIG_MIN, LOG_SIG_MAX), y)
        out_ref[...] = y

    return kernel


# ----------------------------- param packing -----------------------------

def pack_params(params, num_inputs, num_actions, hidden_dim,
                param_dtype=jnp.bfloat16):
    """Packs the 16 torch-style tensors into lane-dense slabs + metadata.

    params: dict with
      w1 (N_in,H), w2/w3/w4 (H+N_in,H)  -- already transposed (in, out); the
      first H rows of w2..w4 multiply x, the remaining N_in rows multiply state
      (matching torch.cat([x, state], dim=1)).
      b1..b4 (H,), wm/wl (H,A), bm/bl (A,).
    """
    N_in, H, A = num_inputs, hidden_dim, num_actions
    h_pad = _rup(H, 128)            # lane-dense hidden width
    c_out = _rup(2 * A, 128)        # lane-dense fused-head / output width
    n_rows = _rup(N_in, 16)         # 16-aligned rows for bf16 sublane packing

    # State-side slab: [W1 | Ws2 | Ws3 | Ws4]  -> (n_rows, 4*h_pad).
    ws = jnp.zeros((n_rows, 4 * h_pad), jnp.float32)
    ws = ws.at[:N_in, 0:H].set(params["w1"])
    for li, name in enumerate(("w2", "w3", "w4")):
        ws = ws.at[:N_in, (li + 1) * h_pad:(li + 1) * h_pad + H].set(
            params[name][H:, :])

    # x-side slab: [Wx2; Wx3; Wx4] row-stacked -> (3*h_pad, h_pad).
    wx = jnp.zeros((3 * h_pad, h_pad), jnp.float32)
    for li, name in enumerate(("w2", "w3", "w4")):
        wx = wx.at[li * h_pad:li * h_pad + H, 0:H].set(params[name][:H, :])

    # Fused head: [Wm | Wl] -> (h_pad, c_out).
    wh = jnp.zeros((h_pad, c_out), jnp.float32)
    wh = wh.at[0:H, 0:A].set(params["wm"])
    wh = wh.at[0:H, A:2 * A].set(params["wl"])

    # Biases stay f32: row 0 = [b1|b2|b3|b4] in h_pad blocks, row 1 = [bm|bl].
    bias = jnp.zeros((8, 4 * h_pad), jnp.float32)
    for li, name in enumerate(("b1", "b2", "b3", "b4")):
        bias = bias.at[0, li * h_pad:li * h_pad + H].set(params[name])
    bias = bias.at[1, 0:A].set(params["bm"])
    bias = bias.at[1, A:2 * A].set(params["bl"])

    meta = dict(num_inputs=N_in, hidden_dim=H, num_actions=A,
                h_pad=h_pad, c_out=c_out)
    return (ws.astype(param_dtype), wx.astype(param_dtype),
            wh.astype(param_dtype), bias, meta)


# ----------------------- pure-JAX fallback (small B) -----------------------

def _forward_from_slabs(state, ws, wx, wh, bias, meta):
    """Same math as the kernel, in plain JAX, for tiny batches."""
    h_pad, A, c_out = meta["h_pad"], meta["num_actions"], meta["c_out"]
    s = state.astype(ws.dtype)
    sc = jnp.dot(s, ws, preferred_element_type=jnp.float32)
    x = jax.nn.relu(sc[:, :h_pad] + bias[0, :h_pad])
    for li in range(3):
        xw = jnp.dot(x.astype(ws.dtype), wx[li * h_pad:(li + 1) * h_pad],
                     preferred_element_type=jnp.float32)
        x = jax.nn.relu(xw + sc[:, (li + 1) * h_pad:(li + 2) * h_pad]
                        + bias[0, (li + 1) * h_pad:(li + 2) * h_pad])
    y = jnp.dot(x.astype(ws.dtype), wh,
                preferred_element_type=jnp.float32) + bias[1, :c_out]
    mean = y[:, :A]
    log_std = jnp.clip(y[:, A:2 * A], LOG_SIG_MIN, LOG_SIG_MAX)
    return mean, log_std


# ------------------------------- wrapper ---------------------------------

def d2rl_policy_forward(state, ws, wx, wh, bias, meta, *, force_pallas=False):
    """Runs the D2RL policy forward pass. Returns (mean, log_std)."""
    N_in = meta["num_inputs"]
    h_pad = meta["h_pad"]
    A = meta["num_actions"]
    c_out = meta["c_out"]

    state = state.astype(jnp.float32)
    B = state.shape[0]

    # Tiny batches cannot amortize the pallas_call launch + input DMAs.
    if B < 128 and not force_pallas:
        return _forward_from_slabs(state, ws, wx, wh, bias, meta)

    # Batch tile: single step for small/medium batches; for large batches use
    # big tiles (<=1024 rows) but force >=2 grid steps so v7x megacore can
    # shard the "parallel" batch axis across both TensorCores.
    if B <= 256:
        TB = _rup(B, 8)
    else:
        TB = min(1024, _rup(-(-B // 2), 8))
    B_pad = _rup(B, TB)
    if B_pad != B:
        state = jnp.pad(state, ((0, B_pad - B), (0, 0)))
    grid = (B_pad // TB,)

    kernel = _make_kernel(h_pad, A, c_out)

    flops = 2 * B_pad * (N_in * 4 * h_pad + 3 * h_pad * h_pad + h_pad * c_out)
    bytes_accessed = (4 * B_pad * N_in                      # state (f32)
                      + 2 * (ws.size + wx.size + wh.size)   # bf16 slabs
                      + 4 * bias.size                       # f32 biases
                      + 4 * B_pad * c_out)                  # output (f32)

    out = pl.pallas_call(
        kernel,
        out_shape=jax.ShapeDtypeStruct((B_pad, c_out), jnp.float32),
        grid_spec=pltpu.PrefetchScalarGridSpec(
            num_scalar_prefetch=0,
            grid=grid,
            in_specs=[
                pl.BlockSpec((TB, N_in), lambda i: (i, 0)),     # state tile
                pl.BlockSpec(ws.shape, lambda i: (0, 0)),       # resident
                pl.BlockSpec(wx.shape, lambda i: (0, 0)),       # resident
                pl.BlockSpec(wh.shape, lambda i: (0, 0)),       # resident
                pl.BlockSpec(bias.shape, lambda i: (0, 0)),     # resident
            ],
            out_specs=pl.BlockSpec((TB, c_out), lambda i: (i, 0)),
        ),
        compiler_params=pltpu.CompilerParams(
            dimension_semantics=("parallel",),
        ),
        cost_estimate=pl.CostEstimate(
            flops=flops, transcendentals=0, bytes_accessed=bytes_accessed),
    )(state, ws, wx, wh, bias)

    mean = out[:B, :A]
    log_std = out[:B, A:2 * A]
    return mean, log_std


# ------------------------- parameter construction -------------------------

def _xavier_uniform(key, fan_in, fan_out):
    # torch.nn.init.xavier_uniform_ (gain=1) for weight of shape (out, in);
    # returned already transposed to (in, out) for x @ W use.
    bound = (6.0 / (fan_in + fan_out)) ** 0.5
    w = jax.random.uniform(key, (fan_out, fan_in), jnp.float32, -bound, bound)
    return w.T


def make_params(key, num_inputs, num_actions, hidden_dim):
    """Synthetic parameters mirroring D2RLGaussianPolicy.__init__ (num_layers=4)."""
    in_dim = hidden_dim + num_inputs
    keys = jax.random.split(key, 6)

    params = {
        "w1": _xavier_uniform(keys[0], num_inputs, hidden_dim),   # (N_in, H)
        "b1": jnp.zeros((hidden_dim,), jnp.float32),
    }
    for i, name in zip(range(1, 4), ["2", "3", "4"]):
        params[f"w{name}"] = _xavier_uniform(keys[i], in_dim, hidden_dim)
        params[f"b{name}"] = jnp.zeros((hidden_dim,), jnp.float32)
    params["wm"] = _xavier_uniform(keys[4], hidden_dim, num_actions)   # (H, A)
    params["bm"] = jnp.zeros((num_actions,), jnp.float32)
    params["wl"] = _xavier_uniform(keys[5], hidden_dim, num_actions)   # (H, A)
    params["bl"] = jnp.zeros((num_actions,), jnp.float32)
    return params


def reference_forward(state, params):
    """Pure-JAX f32 reference matching the PyTorch forward (num_layers=4)."""
    s = state
    x = jax.nn.relu(s @ params["w1"] + params["b1"])
    for i in ("2", "3", "4"):
        x = jnp.concatenate([x, s], axis=1)
        x = jax.nn.relu(x @ params[f"w{i}"] + params[f"b{i}"])
    mean = x @ params["wm"] + params["bm"]
    log_std = jnp.clip(x @ params["wl"] + params["bl"], LOG_SIG_MIN, LOG_SIG_MAX)
    return mean, log_std


if __name__ == "__main__":
    key = jax.random.PRNGKey(0)
    k_state, k_params, k_state2 = jax.random.split(key, 3)

    B, NUM_INPUTS, HIDDEN, NUM_ACTIONS = 8, 16, 32, 8

    state = jax.random.normal(k_state, (B, NUM_INPUTS), jnp.float32)
    params = make_params(k_params, NUM_INPUTS, NUM_ACTIONS, HIDDEN)
    ws, wx, wh, bias, meta = pack_params(params, NUM_INPUTS, NUM_ACTIONS, HIDDEN)

    # Small-batch demo: force the Pallas path (wrapper would otherwise dispatch
    # tiny batches to the pure-JAX fallback, per the perf review).
    mean, log_std = d2rl_policy_forward(state, ws, wx, wh, bias, meta,
                                        force_pallas=True)
    mean, log_std = jax.block_until_ready((mean, log_std))

    ref_mean, ref_log_std = reference_forward(state, params)
    assert mean.shape == (B, NUM_ACTIONS) and log_std.shape == (B, NUM_ACTIONS)
    # bf16 weight slabs -> compare against the f32 reference at bf16 tolerance.
    assert jnp.allclose(mean, ref_mean, atol=5e-2, rtol=5e-2)
    assert jnp.allclose(log_std, ref_log_std, atol=5e-2, rtol=5e-2)
    # And against the matching bf16 pure-JAX path at tight tolerance.
    jm, jl = _forward_from_slabs(state, ws, wx, wh, bias, meta)
    assert jnp.allclose(mean, jm, atol=5e-3, rtol=5e-3)
    assert jnp.allclose(log_std, jl, atol=5e-3, rtol=5e-3)
    assert float(jnp.max(log_std)) <= LOG_SIG_MAX
    assert float(jnp.min(log_std)) >= LOG_SIG_MIN

    # Multi-tile path: B > 256 -> >=2 grid steps + batch-row padding exercised.
    B2 = 300
    state2 = jax.random.normal(k_state2, (B2, NUM_INPUTS), jnp.float32)
    mean2, log_std2 = d2rl_policy_forward(state2, ws, wx, wh, bias, meta)
    mean2, log_std2 = jax.block_until_ready((mean2, log_std2))
    r2m, r2l = reference_forward(state2, params)
    assert mean2.shape == (B2, NUM_ACTIONS) and log_std2.shape == (B2, NUM_ACTIONS)
    assert jnp.allclose(mean2, r2m, atol=5e-2, rtol=5e-2)
    assert jnp.allclose(log_std2, r2l, atol=5e-2, rtol=5e-2)

    print("KERNEL_OK")
</pallas_src>

<mosaic_0001>
module attributes {stable_mosaic.version = 11 : i64} {
  func.func @kernel(%arg0: i32, %arg1: memref<8x16xf32, #tpu.memory_space<vmem>>, %arg2: memref<16x512xbf16, #tpu.memory_space<vmem>>, %arg3: memref<384x128xbf16, #tpu.memory_space<vmem>>, %arg4: memref<128x128xbf16, #tpu.memory_space<vmem>>, %arg5: memref<8x512xf32, #tpu.memory_space<vmem>>, %arg6: memref<8x128xf32, #tpu.memory_space<vmem>>) attributes {dimension_semantics = [#tpu.dimension_semantics<parallel>], iteration_bounds = array<i64: 1>, scalar_prefetch = 0 : i64, scratch_operands = 0 : i64, tpu.core_type = #tpu.core_type<tc>, window_params = [{transform_indices = @transform_0, window_bounds = array<i64: 8, 16>}, {pipeline_mode = #tpu.pipeline_mode<synchronous>, transform_indices = @transform_1, window_bounds = array<i64: 16, 512>}, {pipeline_mode = #tpu.pipeline_mode<synchronous>, transform_indices = @transform_2, window_bounds = array<i64: 384, 128>}, {pipeline_mode = #tpu.pipeline_mode<synchronous>, transform_indices = @transform_3, window_bounds = array<i64: 128, 128>}, {pipeline_mode = #tpu.pipeline_mode<synchronous>, transform_indices = @transform_4, window_bounds = array<i64: 8, 512>}, {transform_indices = @transform_5, window_bounds = array<i64: 8, 128>}]} {
    %c0 = arith.constant 0 : index
    %c0_0 = arith.constant 0 : index
    %0 = vector.load %arg1[%c0, %c0_0] : memref<8x16xf32, #tpu.memory_space<vmem>>, vector<8x16xf32>
    %1 = arith.truncf %0 : vector<8x16xf32> to vector<8x16xbf16>
    %c0_1 = arith.constant 0 : index
    %c0_2 = arith.constant 0 : index
    %2 = vector.load %arg2[%c0_1, %c0_2] : memref<16x512xbf16, #tpu.memory_space<vmem>>, vector<16x512xbf16>
    %cst = arith.constant dense<0.000000e+00> : vector<8x512xf32>
    %3 = tpu.matmul %1, %2, %cst {dimension_numbers = #tpu.dot_dimension_numbers<[1], [0], [0], [1], [0, 0, 1, 1], [], []>} : vector<8x16xbf16>, vector<16x512xbf16>, vector<8x512xf32> -> vector<8x512xf32>
    %4 = vector.extract_strided_slice %3 {offsets = [0, 0], sizes = [8, 128], strides = [1, 1]} : vector<8x512xf32> to vector<8x128xf32>
    %c0_3 = arith.constant 0 : index
    %c0_4 = arith.constant 0 : index
    %5 = vector.load %arg5[%c0_3, %c0_4] : memref<8x512xf32, #tpu.memory_space<vmem>>, vector<1x128xf32>
    %6 = vector.broadcast %5 : vector<1x128xf32> to vector<8x128xf32>
    %7 = arith.addf %4, %6 : vector<8x128xf32>
    %cst_5 = arith.constant 0.000000e+00 : f32
    %8 = vector.broadcast %cst_5 : f32 to vector<8x128xf32>
    %9 = arith.maximumf %7, %8 : vector<8x128xf32>
    %10 = arith.truncf %9 : vector<8x128xf32> to vector<8x128xbf16>
    %c0_6 = arith.constant 0 : index
    %c0_7 = arith.constant 0 : index
    %11 = vector.load %arg3[%c0_6, %c0_7] : memref<384x128xbf16, #tpu.memory_space<vmem>>, vector<128x128xbf16>
    %cst_8 = arith.constant dense<0.000000e+00> : vector<8x128xf32>
    %12 = tpu.matmul %10, %11, %cst_8 {dimension_numbers = #tpu.dot_dimension_numbers<[1], [0], [0], [1], [0, 0, 1, 1], [], []>} : vector<8x128xbf16>, vector<128x128xbf16>, vector<8x128xf32> -> vector<8x128xf32>
    %13 = vector.extract_strided_slice %3 {offsets = [0, 128], sizes = [8, 128], strides = [1, 1]} : vector<8x512xf32> to vector<8x128xf32>
    %14 = arith.addf %12, %13 : vector<8x128xf32>
    %c0_9 = arith.constant 0 : index
    %c128 = arith.constant 128 : index
    %15 = vector.load %arg5[%c0_9, %c128] : memref<8x512xf32, #tpu.memory_space<vmem>>, vector<1x128xf32>
    %16 = vector.broadcast %15 : vector<1x128xf32> to vector<8x128xf32>
    %17 = arith.addf %14, %16 : vector<8x128xf32>
    %cst_10 = arith.constant 0.000000e+00 : f32
    %18 = vector.broadcast %cst_10 : f32 to vector<8x128xf32>
    %19 = arith.maximumf %17, %18 : vector<8x128xf32>
    %20 = arith.truncf %19 : vector<8x128xf32> to vector<8x128xbf16>
    %c128_11 = arith.constant 128 : index
    %c0_12 = arith.constant 0 : index
    %21 = vector.load %arg3[%c128_11, %c0_12] : memref<384x128xbf16, #tpu.memory_space<vmem>>, vector<128x128xbf16>
    %cst_13 = arith.constant dense<0.000000e+00> : vector<8x128xf32>
    %22 = tpu.matmul %20, %21, %cst_13 {dimension_numbers = #tpu.dot_dimension_numbers<[1], [0], [0], [1], [0, 0, 1, 1], [], []>} : vector<8x128xbf16>, vector<128x128xbf16>, vector<8x128xf32> -> vector<8x128xf32>
    %23 = vector.extract_strided_slice %3 {offsets = [0, 256], sizes = [8, 128], strides = [1, 1]} : vector<8x512xf32> to vector<8x128xf32>
    %24 = arith.addf %22, %23 : vector<8x128xf32>
    %c0_14 = arith.constant 0 : index
    %c256 = arith.constant 256 : index
    %25 = vector.load %arg5[%c0_14, %c256] : memref<8x512xf32, #tpu.memory_space<vmem>>, vector<1x128xf32>
    %26 = vector.broadcast %25 : vector<1x128xf32> to vector<8x128xf32>
    %27 = arith.addf %24, %26 : vector<8x128xf32>
    %cst_15 = arith.constant 0.000000e+00 : f32
    %28 = vector.broadcast %cst_15 : f32 to vector<8x128xf32>
    %29 = arith.maximumf %27, %28 : vector<8x128xf32>
    %30 = arith.truncf %29 : vector<8x128xf32> to vector<8x128xbf16>
    %c256_16 = arith.constant 256 : index
    %c0_17 = arith.constant 0 : index
    %31 = vector.load %arg3[%c256_16, %c0_17] : memref<384x128xbf16, #tpu.memory_space<vmem>>, vector<128x128xbf16>
    %cst_18 = arith.constant dense<0.000000e+00> : vector<8x128xf32>
    %32 = tpu.matmul %30, %31, %cst_18 {dimension_numbers = #tpu.dot_dimension_numbers<[1], [0], [0], [1], [0, 0, 1, 1], [], []>} : vector<8x128xbf16>, vector<128x128xbf16>, vector<8x128xf32> -> vector<8x128xf32>
    %33 = vector.extract_strided_slice %3 {offsets = [0, 384], sizes = [8, 128], strides = [1, 1]} : vector<8x512xf32> to vector<8x128xf32>
    %34 = arith.addf %32, %33 : vector<8x128xf32>
    %c0_19 = arith.constant 0 : index
    %c384 = arith.constant 384 : index
    %35 = vector.load %arg5[%c0_19, %c384] : memref<8x512xf32, #tpu.memory_space<vmem>>, vector<1x128xf32>
    %36 = vector.broadcast %35 : vector<1x128xf32> to vector<8x128xf32>
    %37 = arith.addf %34, %36 : vector<8x128xf32>
    %cst_20 = arith.constant 0.000000e+00 : f32
    %38 = vector.broadcast %cst_20 : f32 to vector<8x128xf32>
    %39 = arith.maximumf %37, %38 : vector<8x128xf32>
    %40 = arith.truncf %39 : vector<8x128xf32> to vector<8x128xbf16>
    %c0_21 = arith.constant 0 : index
    %c0_22 = arith.constant 0 : index
    %41 = vector.load %arg4[%c0_21, %c0_22] : memref<128x128xbf16, #tpu.memory_space<vmem>>, vector<128x128xbf16>
    %cst_23 = arith.constant dense<0.000000e+00> : vector<8x128xf32>
    %42 = tpu.matmul %40, %41, %cst_23 {dimension_numbers = #tpu.dot_dimension_numbers<[1], [0], [0], [1], [0, 0, 1, 1], [], []>} : vector<8x128xbf16>, vector<128x128xbf16>, vector<8x128xf32> -> vector<8x128xf32>
    %c1 = arith.constant 1 : index
    %c0_24 = arith.constant 0 : index
    %43 = vector.load %arg5[%c1, %c0_24] : memref<8x512xf32, #tpu.memory_space<vmem>>, vector<1x128xf32>
    %44 = vector.broadcast %43 : vector<1x128xf32> to vector<8x128xf32>
    %45 = arith.addf %42, %44 : vector<8x128xf32>
    %46 = tpu.iota {dimensions = array<i32: 1>} : vector<8x128xi32>
    %c8_i32 = arith.constant 8 : i32
    %47 = vector.broadcast %c8_i32 : i32 to vector<8x128xi32>
    %48 = arith.cmpi sge, %46, %47 : vector<8x128xi32>
    %c16_i32 = arith.constant 16 : i32
    %49 = vector.broadcast %c16_i32 : i32 to vector<8x128xi32>
    %50 = arith.cmpi slt, %46, %49 : vector<8x128xi32>
    %51 = arith.andi %48, %50 : vector<8x128xi1>
    %cst_25 = arith.constant -5.000000e+00 : f32
    %cst_26 = arith.constant 2.000000e+00 : f32
    %52 = vector.broadcast %cst_25 : f32 to vector<8x128xf32>
    %53 = arith.maximumf %52, %45 : vector<8x128xf32>
    %54 = vector.broadcast %cst_26 : f32 to vector<8x128xf32>
    %55 = arith.minimumf %54, %53 : vector<8x128xf32>
    %56 = arith.select %51, %55, %45 : vector<8x128xi1>, vector<8x128xf32>
    %c0_27 = arith.constant 0 : index
    %c0_28 = arith.constant 0 : index
    %57 = vector.load %arg6[%c0_27, %c0_28] : memref<8x128xf32, #tpu.memory_space<vmem>>, vector<8x128xf32>
    tpu.vector_store %arg6[%c0_27, %c0_28], %56 {strides = array<i32>} : memref<8x128xf32, #tpu.memory_space<vmem>>, vector<8x128xf32>,
    return
  }
  func.func @transform_0(%arg0: i32) -> (i32, i32) {
    %c0_i32 = arith.constant 0 : i32
    %c0_i32_0 = arith.constant 0 : i32
    return %arg0, %c0_i32 : i32, i32
  }
  func.func @transform_1(%arg0: i32) -> (i32, i32) {
    %c0_i32 = arith.constant 0 : i32
    %c0_i32_0 = arith.constant 0 : i32
    %c0_i32_1 = arith.constant 0 : i32
    return %c0_i32, %c0_i32_0 : i32, i32
  }
  func.func @transform_2(%arg0: i32) -> (i32, i32) {
    %c0_i32 = arith.constant 0 : i32
    %c0_i32_0 = arith.constant 0 : i32
    %c0_i32_1 = arith.constant 0 : i32
    return %c0_i32, %c0_i32_0 : i32, i32
  }
  func.func @transform_3(%arg0: i32) -> (i32, i32) {
    %c0_i32 = arith.constant 0 : i32
    %c0_i32_0 = arith.constant 0 : i32
    %c0_i32_1 = arith.constant 0 : i32
    return %c0_i32, %c0_i32_0 : i32, i32
  }
  func.func @transform_4(%arg0: i32) -> (i32, i32) {
    %c0_i32 = arith.constant 0 : i32
    %c0_i32_0 = arith.constant 0 : i32
    %c0_i32_1 = arith.constant 0 : i32
    return %c0_i32, %c0_i32_0 : i32, i32
  }
  func.func @transform_5(%arg0: i32) -> (i32, i32) {
    %c0_i32 = arith.constant 0 : i32
    %c0_i32_0 = arith.constant 0 : i32
    return %arg0, %c0_i32 : i32, i32
  }
}

</mosaic_0001>

<llo_original>
// kernel: tpu_custom_call.1
$region0: #{tpu_custom_call.1}
  #allocation0 [shape = 'u32[]', space=smem, size = 0x4, offset = 0x4, fixed_abs, tag = 'smem constant byte address 0x4 - core index']
  #allocation1 [shape = 'u32[72,128]{1,0:T(1,128)}', space=vmem, size = 0x9000, scoped, tag = 'internal scratch']
  %s0 = inlined_call_operand.hbm [shape: f32[8,16], index: 0, kind: input, shape index: {}]
  %s1 = inlined_call_operand.hbm [shape: bf16[16,512], index: 1, kind: input, shape index: {}]
  %s2 = inlined_call_operand.hbm [shape: bf16[384,128], index: 2, kind: input, shape index: {}]
  %s3 = inlined_call_operand.hbm [shape: bf16[128,128], index: 3, kind: input, shape index: {}]
  %s4 = inlined_call_operand.hbm [shape: f32[8,512], index: 4, kind: input, shape index: {}]
  %s5 = inlined_call_operand.hbm [shape: f32[8,128], index: 5, kind: output, shape index: {}]
  %s6 = sld [smem:[#allocation0]]
  $region50: #{tpu_custom_call.1} parent=0
    _
  %s8 = ssub.s32 1, %s6
  %s9 = scalar_select 0, %s8, %s6
  $region1: #{tpu_custom_call.1} parent=0
    #allocation2 [shape = 'u8[4096]{0}', space=vmem, size = 0x1000, scoped, tag = 'input window, operand 0, single buffered']
    #allocation3 [shape = 's32[1]{0}', space=sflag, size = 0x4, scoped, tag = 'scoped memory for tpu_custom_call.1']
    #allocation4 [shape = 's32[1]{0}', space=sflag, size = 0x4, scoped, tag = 'scoped memory for tpu_custom_call.1']
    #allocation5 [shape = 'u8[16384]{0}', space=vmem, size = 0x4000, scoped, tag = 'input window, operand 1, single buffered']
    #allocation6 [shape = 's32[1]{0}', space=sflag, size = 0x4, scoped, tag = 'scoped memory for tpu_custom_call.1']
    #allocation7 [shape = 'u8[98304]{0}', space=vmem, size = 0x18000, scoped, tag = 'input window, operand 2, single buffered']
    #allocation8 [shape = 'u8[32768]{0}', space=vmem, size = 0x8000, scoped, tag = 'input window, operand 3, single buffered']
    #allocation9 [shape = 's32[1]{0}', space=sflag, size = 0x4, scoped, tag = 'scoped memory for tpu_custom_call.1']
    #allocation10 [shape = 'u8[16384]{0}', space=vmem, size = 0x4000, scoped, tag = 'input window, operand 4, single buffered']
    #allocation11 [shape = 'u8[4096]{0}', space=vmem, size = 0x1000, scoped, tag = 'output window, operand 0, single buffered']
    %10 = vsyncpa [#allocation3], 0
    %11 = vsyncpa [#allocation6], 0
    %12 = vsyncpa [#allocation9], 0
    %13 = vsyncpa [#allocation4], 0
    // Predicated region
    $region2: #{tpu_custom_call.1} parent=1 // pred_check
      _
    $region3: #{tpu_custom_call.1} parent=1 // pred_check_branch
      %15 = sbr.rel (0) target = $region5
    $region4: #{tpu_custom_call.1} parent=1 // pred_region
      %17 = vsyncadd [#allocation3], 0
      %s19 = sshll.u32 %s0, 4
      %s20 = int_to_ptr.hbm [resolvable:$true] %s19
      %s21 = sshll.u32 [#allocation2], 4
      %s22 = int_to_ptr.vmem [resolvable:$true] %s21
      %24 = dma.hbm_to_vmem [thread:$0]  %s20, 128, %s22, [#allocation3]
    $region5: #{tpu_custom_call.1} parent=1 // pred_fallthru
      _
    // Predicated region
    $region6: #{tpu_custom_call.1} parent=1 // pred_check
      _
    $region7: #{tpu_custom_call.1} parent=1 // pred_check_branch
      %26 = sbr.rel (0) target = $region9
    $region8: #{tpu_custom_call.1} parent=1 // pred_region
      %28 = vsyncadd [#allocation6], 0
      %s29 = sshll.u32 %s1, 4
      %s30 = int_to_ptr.hbm [resolvable:$true] %s29
      %s31 = sshll.u32 [#allocation5], 4
      %s32 = int_to_ptr.vmem [resolvable:$true] %s31
      %37 = dma.hbm_to_vmem [thread:$0]  %s30, 512, %s32, [#allocation6], 256, 256, 16
    $region9: #{tpu_custom_call.1} parent=1 // pred_fallthru
      _
    // Predicated region
    $region10: #{tpu_custom_call.1} parent=1 // pred_check
      _
    $region11: #{tpu_custom_call.1} parent=1 // pred_check_branch
      %39 = sbr.rel (0) target = $region13
    $region12: #{tpu_custom_call.1} parent=1 // pred_region
      %41 = vsyncadd [#allocation6], 0
      %s42 = sshll.u32 %s2, 4
      %s43 = int_to_ptr.hbm [resolvable:$true] %s42
      %s44 = sshll.u32 [#allocation7], 4
      %s45 = int_to_ptr.vmem [resolvable:$true] %s44
      %50 = dma.hbm_to_vmem [thread:$0]  %s43, 3072, %s45, [#allocation6], 64, 64, 4
    $region13: #{tpu_custom_call.1} parent=1 // pred_fallthru
      _
    // Predicated region
    $region14: #{tpu_custom_call.1} parent=1 // pred_check
      _
    $region15: #{tpu_custom_call.1} parent=1 // pred_check_branch
      %52 = sbr.rel (0) target = $region17
    $region16: #{tpu_custom_call.1} parent=1 // pred_region
      %54 = vsyncadd [#allocation9], 0
      %s55 = sshll.u32 %s3, 4
      %s56 = int_to_ptr.hbm [resolvable:$true] %s55
      %s57 = sshll.u32 [#allocation8], 4
      %s58 = int_to_ptr.vmem [resolvable:$true] %s57
      %63 = dma.hbm_to_vmem [thread:$0]  %s56, 1024, %s58, [#allocation9], 64, 64, 4
    $region17: #{tpu_custom_call.1} parent=1 // pred_fallthru
      _
    // Predicated region
    $region18: #{tpu_custom_call.1} parent=1 // pred_check
      _
    $region19: #{tpu_custom_call.1} parent=1 // pred_check_branch
      %65 = sbr.rel (0) target = $region21
    $region20: #{tpu_custom_call.1} parent=1 // pred_region
      %67 = vsyncadd [#allocation9], 0
      %s69 = sshll.u32 %s4, 4
      %s70 = int_to_ptr.hbm [resolvable:$true] %s69
      %s71 = sshll.u32 [#allocation10], 4
      %s72 = int_to_ptr.vmem [resolvable:$true] %s71
      %74 = dma.hbm_to_vmem [thread:$0]  %s70, 512, %s72, [#allocation9]
    $region21: #{tpu_custom_call.1} parent=1 // pred_fallthru
      _
    // Predicated region
    $region22: #{tpu_custom_call.1} parent=1 // pred_check
      _
    $region23: #{tpu_custom_call.1} parent=1 // pred_check_branch
      %76 = sbr.rel (0) target = $region25
    $region24: #{tpu_custom_call.1} parent=1 // pred_region
      %78 = dma.done [#allocation3], 128
    $region25: #{tpu_custom_call.1} parent=1 // pred_fallthru
      _
    // Predicated region
    $region26: #{tpu_custom_call.1} parent=1 // pred_check
      _
    $region27: #{tpu_custom_call.1} parent=1 // pred_check_branch
      %80 = sbr.rel (0) target = $region29
    $region28: #{tpu_custom_call.1} parent=1 // pred_region
      %82 = dma.done [#allocation6], 512
    $region29: #{tpu_custom_call.1} parent=1 // pred_fallthru
      _
    // Predicated region
    $region30: #{tpu_custom_call.1} parent=1 // pred_check
      _
    $region31: #{tpu_custom_call.1} parent=1 // pred_check_branch
      %84 = sbr.rel (0) target = $region33
    $region32: #{tpu_custom_call.1} parent=1 // pred_region
      %86 = dma.done [#allocation6], 3072
    $region33: #{tpu_custom_call.1} parent=1 // pred_fallthru
      _
    // Predicated region
    $region34: #{tpu_custom_call.1} parent=1 // pred_check
      _
    $region35: #{tpu_custom_call.1} parent=1 // pred_check_branch
      %88 = sbr.rel (0) target = $region37
    $region36: #{tpu_custom_call.1} parent=1 // pred_region
      %90 = dma.done [#allocation9], 1024
    $region37: #{tpu_custom_call.1} parent=1 // pred_fallthru
      _
    // Predicated region
    $region38: #{tpu_custom_call.1} parent=1 // pred_check
      _
    $region39: #{tpu_custom_call.1} parent=1 // pred_check_branch
      %92 = sbr.rel (0) target = $region41
    $region40: #{tpu_custom_call.1} parent=1 // pred_region
      %94 = dma.done [#allocation9], 512
    $region41: #{tpu_custom_call.1} parent=1 // pred_fallthru
      _
    %v96 = vld [vmem:[#allocation2] sm:$0xff]
    %v97 = vpack.c.bf16 %v96, %v96
    %v98 = vld [vmem:[#allocation5] sm:$0xff]
    %v99 = vld [vmem:[#allocation5 + $0x8] sm:$0xff]
    %v100 = vld [vmem:[#allocation5 + $0x10] sm:$0xff]
    %v101 = vld [vmem:[#allocation5 + $0x18] sm:$0xff]
    %v106 = vunpack.c.l.b16 %v98
    %v107 = vunpack.c.h.b16 %v98
    %v108 = vunpack.c.l.b16 %v99
    %v109 = vunpack.c.h.b16 %v99
    %v110 = vunpack.c.l.b16 %v100
    %v111 = vunpack.c.h.b16 %v100
    %v112 = vunpack.c.l.b16 %v101
    %v113 = vunpack.c.h.b16 %v101
    %v114 = vpack.c.b16 %v110, %v106
    %v115 = vpack.c.b16 %v111, %v107
    %v116 = vpack.c.b16 %v112, %v108
    %v117 = vpack.c.b16 %v113, %v109
    %vm122 = vcmask 130048
    %v124 = vsel %vm122, %v97, 0
    %126 = vmatpush.bf16.msra.mxu0 0
    %127 = vmatpush.bf16.msra.mxu0 0
    %128 = vmatpush.bf16.msra.mxu0 0
    %129 = vmatpush.bf16.msra.mxu0 0
    %130 = vmatpush.bf16.msra.mxu0 0
    %131 = vmatpush.bf16.msra.mxu0 0
    %132 = vmatpush.bf16.msra.mxu0 0
    %133 = vmatpush.bf16.msra.mxu0 %v114
    %134 = vmatmul.bf16.gmra.mxu0 %v124
    %v135 = vpop.f32.mrf.mxu0
    %v136 = vadd.f32 0.0, %v135
    %v137 = vpop.f32.mrf.mxu0
    %138 = vdwg.mxu0
    %139 = vmatpush.bf16.msra.mxu0 0
    %140 = vmatpush.bf16.msra.mxu0 0
    %141 = vmatpush.bf16.msra.mxu0 0
    %142 = vmatpush.bf16.msra.mxu0 0
    %143 = vmatpush.bf16.msra.mxu0 0
    %144 = vmatpush.bf16.msra.mxu0 0
    %145 = vmatpush.bf16.msra.mxu0 0
    %146 = vmatpush.bf16.msra.mxu0 %v115
    %147 = vmatmul.bf16.gmra.mxu0 %v124
    %v148 = vpop.f32.mrf.mxu0
    %v149 = vadd.f32 0.0, %v148
    %v150 = vpop.f32.mrf.mxu0
    %151 = vdwg.mxu0
    %152 = vmatpush.bf16.msra.mxu0 0
    %153 = vmatpush.bf16.msra.mxu0 0
    %154 = vmatpush.bf16.msra.mxu0 0
    %155 = vmatpush.bf16.msra.mxu0 0
    %156 = vmatpush.bf16.msra.mxu0 0
    %157 = vmatpush.bf16.msra.mxu0 0
    %158 = vmatpush.bf16.msra.mxu0 0
    %159 = vmatpush.bf16.msra.mxu0 %v116
    %160 = vmatmul.bf16.gmra.mxu0 %v124
    %v161 = vpop.f32.mrf.mxu0
    %v162 = vadd.f32 0.0, %v161
    %v163 = vpop.f32.mrf.mxu0
    %164 = vdwg.mxu0
    %165 = vmatpush.bf16.msra.mxu0 0
    %166 = vmatpush.bf16.msra.mxu0 0
    %167 = vmatpush.bf16.msra.mxu0 0
    %168 = vmatpush.bf16.msra.mxu0 0
    %169 = vmatpush.bf16.msra.mxu0 0
    %170 = vmatpush.bf16.msra.mxu0 0
    %171 = vmatpush.bf16.msra.mxu0 0
    %172 = vmatpush.bf16.msra.mxu0 %v117
    %173 = vmatmul.bf16.gmra.mxu0 %v124
    %v174 = vpop.f32.mrf.mxu0
    %v175 = vadd.f32 0.0, %v174
    %v176 = vpop.f32.mrf.mxu0
    %177 = vdwg.mxu0
    %v178 = vld [vmem:[#allocation10] ss:$0 sm:$0xff]
    %v179 = vadd.f32 %v136, %v178
    %v180 = vmax.f32 %v179, 0.0
    %v181 = vpack.c.bf16 %v180, %v180
    %v182 = vld [vmem:[#allocation7] sm:$0xf]
    %v183 = vld [vmem:[#allocation7 + $0x4] sm:$0xf]
    %v184 = vld [vmem:[#allocation7 + $0x8] sm:$0xf]
    %v185 = vld [vmem:[#allocation7 + $0xc] sm:$0xf]
    %v186 = vld [vmem:[#allocation7 + $0x10] sm:$0xf]
    %v187 = vld [vmem:[#allocation7 + $0x14] sm:$0xf]
    %v188 = vld [vmem:[#allocation7 + $0x18] sm:$0xf]
    %v189 = vld [vmem:[#allocation7 + $0x1c] sm:$0xf]
    %v190 = vld [vmem:[#allocation7 + $0x20] sm:$0xf]
    %v191 = vld [vmem:[#allocation7 + $0x24] sm:$0xf]
    %v192 = vld [vmem:[#allocation7 + $0x28] sm:$0xf]
    %v193 = vld [vmem:[#allocation7 + $0x2c] sm:$0xf]
    %v194 = vld [vmem:[#allocation7 + $0x30] sm:$0xf]
    %v195 = vld [vmem:[#allocation7 + $0x34] sm:$0xf]
    %v196 = vld [vmem:[#allocation7 + $0x38] sm:$0xf]
    %v197 = vld [vmem:[#allocation7 + $0x3c] sm:$0xf]
    %v214 = vunpack.c.l.b16 %v182
    %v215 = vunpack.c.l.b16 %v183
    %v216 = vunpack.c.l.b16 %v184
    %v217 = vunpack.c.l.b16 %v185
    %v218 = vunpack.c.l.b16 %v186
    %v219 = vunpack.c.l.b16 %v187
    %v220 = vunpack.c.l.b16 %v188
    %v221 = vunpack.c.l.b16 %v189
    %v222 = vunpack.c.l.b16 %v190
    %v223 = vunpack.c.l.b16 %v191
    %v224 = vunpack.c.l.b16 %v192
    %v225 = vunpack.c.l.b16 %v193
    %v226 = vunpack.c.l.b16 %v194
    %v227 = vunpack.c.l.b16 %v195
    %v228 = vunpack.c.l.b16 %v196
    %v229 = vunpack.c.l.b16 %v197
    %v230 = vpack.c.b16 %v215, %v214
    %v231 = vpack.c.b16 %v217, %v216
    %v232 = vpack.c.b16 %v219, %v218
    %v233 = vpack.c.b16 %v221, %v220
    %v234 = vpack.c.b16 %v223, %v222
    %v235 = vpack.c.b16 %v225, %v224
    %v236 = vpack.c.b16 %v227, %v226
    %v237 = vpack.c.b16 %v229, %v228
    %246 = vmatpush.bf16.msra.mxu0 %v237
    %247 = vmatpush.bf16.msra.mxu0 %v236
    %248 = vmatpush.bf16.msra.mxu0 %v235
    %249 = vmatpush.bf16.msra.mxu0 %v234
    %250 = vmatpush.bf16.msra.mxu0 %v233
    %251 = vmatpush.bf16.msra.mxu0 %v232
    %252 = vmatpush.bf16.msra.mxu0 %v231
    %253 = vmatpush.bf16.msra.mxu0 %v230
    %254 = vmatmul.bf16.gmra.mxu0 %v181
    %v255 = vpop.f32.mrf.mxu0
    %v256 = vadd.f32 %v149, %v255
    %v257 = vpop.f32.mrf.mxu0
    %258 = vdwg.mxu0
    %v259 = vld [vmem:[#allocation10 + $0x8] ss:$0 sm:$0xff]
    %v260 = vadd.f32 %v256, %v259
    %v261 = vmax.f32 %v260, 0.0
    %v262 = vpack.c.bf16 %v261, %v261
    %v263 = vld [vmem:[#allocation7 + $0x40] sm:$0xf]
    %v264 = vld [vmem:[#allocation7 + $0x44] sm:$0xf]
    %v265 = vld [vmem:[#allocation7 + $0x48] sm:$0xf]
    %v266 = vld [vmem:[#allocation7 + $0x4c] sm:$0xf]
    %v267 = vld [vmem:[#allocation7 + $0x50] sm:$0xf]
    %v268 = vld [vmem:[#allocation7 + $0x54] sm:$0xf]
    %v269 = vld [vmem:[#allocation7 + $0x58] sm:$0xf]
    %v270 = vld [vmem:[#allocation7 + $0x5c] sm:$0xf]
    %v271 = vld [vmem:[#allocation7 + $0x60] sm:$0xf]
    %v272 = vld [vmem:[#allocation7 + $0x64] sm:$0xf]
    %v273 = vld [vmem:[#allocation7 + $0x68] sm:$0xf]
    %v274 = vld [vmem:[#allocation7 + $0x6c] sm:$0xf]
    %v275 = vld [vmem:[#allocation7 + $0x70] sm:$0xf]
    %v276 = vld [vmem:[#allocation7 + $0x74] sm:$0xf]
    %v277 = vld [vmem:[#allocation7 + $0x78] sm:$0xf]
    %v278 = vld [vmem:[#allocation7 + $0x7c] sm:$0xf]
    %v295 = vunpack.c.l.b16 %v263
    %v296 = vunpack.c.l.b16 %v264
    %v297 = vunpack.c.l.b16 %v265
    %v298 = vunpack.c.l.b16 %v266
    %v299 = vunpack.c.l.b16 %v267
    %v300 = vunpack.c.l.b16 %v268
    %v301 = vunpack.c.l.b16 %v269
    %v302 = vunpack.c.l.b16 %v270
    %v303 = vunpack.c.l.b16 %v271
    %v304 = vunpack.c.l.b16 %v272
    %v305 = vunpack.c.l.b16 %v273
    %v306 = vunpack.c.l.b16 %v274
    %v307 = vunpack.c.l.b16 %v275
    %v308 = vunpack.c.l.b16 %v276
    %v309 = vunpack.c.l.b16 %v277
    %v310 = vunpack.c.l.b16 %v278
    %v311 = vpack.c.b16 %v296, %v295
    %v312 = vpack.c.b16 %v298, %v297
    %v313 = vpack.c.b16 %v300, %v299
    %v314 = vpack.c.b16 %v302, %v301
    %v315 = vpack.c.b16 %v304, %v303
    %v316 = vpack.c.b16 %v306, %v305
    %v317 = vpack.c.b16 %v308, %v307
    %v318 = vpack.c.b16 %v310, %v309
    %327 = vmatpush.bf16.msra.mxu0 %v318
    %328 = vmatpush.bf16.msra.mxu0 %v317
    %329 = vmatpush.bf16.msra.mxu0 %v316
    %330 = vmatpush.bf16.msra.mxu0 %v315
    %331 = vmatpush.bf16.msra.mxu0 %v314
    %332 = vmatpush.bf16.msra.mxu0 %v313
    %333 = vmatpush.bf16.msra.mxu0 %v312
    %334 = vmatpush.bf16.msra.mxu0 %v311
    %335 = vmatmul.bf16.gmra.mxu0 %v262
    %v336 = vpop.f32.mrf.mxu0
    %v337 = vadd.f32 %v162, %v336
    %v338 = vpop.f32.mrf.mxu0
    %339 = vdwg.mxu0
    %v340 = vld [vmem:[#allocation10 + $0x10] ss:$0 sm:$0xff]
    %v341 = vadd.f32 %v337, %v340
    %v342 = vmax.f32 %v341, 0.0
    %v343 = vpack.c.bf16 %v342, %v342
    %v344 = vld [vmem:[#allocation7 + $0x80] sm:$0xf]
    %v345 = vld [vmem:[#allocation7 + $0x84] sm:$0xf]
    %v346 = vld [vmem:[#allocation7 + $0x88] sm:$0xf]
    %v347 = vld [vmem:[#allocation7 + $0x8c] sm:$0xf]
    %v348 = vld [vmem:[#allocation7 + $0x90] sm:$0xf]
    %v349 = vld [vmem:[#allocation7 + $0x94] sm:$0xf]
    %v350 = vld [vmem:[#allocation7 + $0x98] sm:$0xf]
    %v351 = vld [vmem:[#allocation7 + $0x9c] sm:$0xf]
    %v352 = vld [vmem:[#allocation7 + $0xa0] sm:$0xf]
    %v353 = vld [vmem:[#allocation7 + $0xa4] sm:$0xf]
    %v354 = vld [vmem:[#allocation7 + $0xa8] sm:$0xf]
    %v355 = vld [vmem:[#allocation7 + $0xac] sm:$0xf]
    %v356 = vld [vmem:[#allocation7 + $0xb0] sm:$0xf]
    %v357 = vld [vmem:[#allocation7 + $0xb4] sm:$0xf]
    %v358 = vld [vmem:[#allocation7 + $0xb8] sm:$0xf]
    %v359 = vld [vmem:[#allocation7 + $0xbc] sm:$0xf]
    %v376 = vunpack.c.l.b16 %v344
    %v377 = vunpack.c.l.b16 %v345
    %v378 = vunpack.c.l.b16 %v346
    %v379 = vunpack.c.l.b16 %v347
    %v380 = vunpack.c.l.b16 %v348
    %v381 = vunpack.c.l.b16 %v349
    %v382 = vunpack.c.l.b16 %v350
    %v383 = vunpack.c.l.b16 %v351
    %v384 = vunpack.c.l.b16 %v352
    %v385 = vunpack.c.l.b16 %v353
    %v386 = vunpack.c.l.b16 %v354
    %v387 = vunpack.c.l.b16 %v355
    %v388 = vunpack.c.l.b16 %v356
    %v389 = vunpack.c.l.b16 %v357
    %v390 = vunpack.c.l.b16 %v358
    %v391 = vunpack.c.l.b16 %v359
    %v392 = vpack.c.b16 %v377, %v376
    %v393 = vpack.c.b16 %v379, %v378
    %v394 = vpack.c.b16 %v381, %v380
    %v395 = vpack.c.b16 %v383, %v382
    %v396 = vpack.c.b16 %v385, %v384
    %v397 = vpack.c.b16 %v387, %v386
    %v398 = vpack.c.b16 %v389, %v388
    %v399 = vpack.c.b16 %v391, %v390
    %408 = vmatpush.bf16.msra.mxu0 %v399
    %409 = vmatpush.bf16.msra.mxu0 %v398
    %410 = vmatpush.bf16.msra.mxu0 %v397
    %411 = vmatpush.bf16.msra.mxu0 %v396
    %412 = vmatpush.bf16.msra.mxu0 %v395
    %413 = vmatpush.bf16.msra.mxu0 %v394
    %414 = vmatpush.bf16.msra.mxu0 %v393
    %415 = vmatpush.bf16.msra.mxu0 %v392
    %416 = vmatmul.bf16.gmra.mxu0 %v343
    %v417 = vpop.f32.mrf.mxu0
    %v418 = vadd.f32 %v175, %v417
    %v419 = vpop.f32.mrf.mxu0
    %420 = vdwg.mxu0
    %v421 = vld [vmem:[#allocation10 + $0x18] ss:$0 sm:$0xff]
    %v422 = vadd.f32 %v418, %v421
    %v423 = vmax.f32 %v422, 0.0
    %v424 = vpack.c.bf16 %v423, %v423
    %v425 = vld [vmem:[#allocation8] sm:$0xf]
    %v426 = vld [vmem:[#allocation8 + $0x4] sm:$0xf]
    %v427 = vld [vmem:[#allocation8 + $0x8] sm:$0xf]
    %v428 = vld [vmem:[#allocation8 + $0xc] sm:$0xf]
    %v429 = vld [vmem:[#allocation8 + $0x10] sm:$0xf]
    %v430 = vld [vmem:[#allocation8 + $0x14] sm:$0xf]
    %v431 = vld [vmem:[#allocation8 + $0x18] sm:$0xf]
    %v432 = vld [vmem:[#allocation8 + $0x1c] sm:$0xf]
    %v433 = vld [vmem:[#allocation8 + $0x20] sm:$0xf]
    %v434 = vld [vmem:[#allocation8 + $0x24] sm:$0xf]
    %v435 = vld [vmem:[#allocation8 + $0x28] sm:$0xf]
    %v436 = vld [vmem:[#allocation8 + $0x2c] sm:$0xf]
    %v437 = vld [vmem:[#allocation8 + $0x30] sm:$0xf]
    %v438 = vld [vmem:[#allocation8 + $0x34] sm:$0xf]
    %v439 = vld [vmem:[#allocation8 + $0x38] sm:$0xf]
    %v440 = vld [vmem:[#allocation8 + $0x3c] sm:$0xf]
    %v441 = vld [vmem:[#allocation10 + $0x1] ss:$0 sm:$0xff]
    %v458 = vunpack.c.l.b16 %v425
    %v459 = vunpack.c.l.b16 %v426
    %v460 = vunpack.c.l.b16 %v427
    %v461 = vunpack.c.l.b16 %v428
    %v462 = vunpack.c.l.b16 %v429
    %v463 = vunpack.c.l.b16 %v430
    %v464 = vunpack.c.l.b16 %v431
    %v465 = vunpack.c.l.b16 %v432
    %v466 = vunpack.c.l.b16 %v433
    %v467 = vunpack.c.l.b16 %v434
    %v468 = vunpack.c.l.b16 %v435
    %v469 = vunpack.c.l.b16 %v436
    %v470 = vunpack.c.l.b16 %v437
    %v471 = vunpack.c.l.b16 %v438
    %v472 = vunpack.c.l.b16 %v439
    %v473 = vunpack.c.l.b16 %v440
    %v474 = vpack.c.b16 %v459, %v458
    %v475 = vpack.c.b16 %v461, %v460
    %v476 = vpack.c.b16 %v463, %v462
    %v477 = vpack.c.b16 %v465, %v464
    %v478 = vpack.c.b16 %v467, %v466
    %v479 = vpack.c.b16 %v469, %v468
    %v480 = vpack.c.b16 %v471, %v470
    %v481 = vpack.c.b16 %v473, %v472
    %490 = vmatpush.bf16.msra.mxu0 %v481
    %491 = vmatpush.bf16.msra.mxu0 %v480
    %492 = vmatpush.bf16.msra.mxu0 %v479
    %493 = vmatpush.bf16.msra.mxu0 %v478
    %494 = vmatpush.bf16.msra.mxu0 %v477
    %495 = vmatpush.bf16.msra.mxu0 %v476
    %496 = vmatpush.bf16.msra.mxu0 %v475
    %497 = vmatpush.bf16.msra.mxu0 %v474
    %498 = vmatmul.bf16.gmra.mxu0 %v424
    %v499 = vpop.f32.mrf.mxu0
    %v500 = vadd.f32 %v441, %v499
    %v501 = vpop.f32.mrf.mxu0
    %502 = vdwg.mxu0
    %v503 = vlaneseq
    %v504 = vand.u32 %v503, 127
    %vm505 = vcmp.ge.s32.totalorder %v504, 8
    %vm506 = vcmp.lt.s32.totalorder %v504, 16
    %vm507 = vmand %vm505, %vm506
    %v508 = vmax.f32 %v500, -5.0
    %v509 = vmin.f32 %v508, 2.0
    %v510 = vsel %vm507, %v509, %v500
    %511 = vst [vmem:[#allocation11] sm:$0xff] %v510
    // Predicated region
    $region42: #{tpu_custom_call.1} parent=1 // pred_check
      _
    $region43: #{tpu_custom_call.1} parent=1 // pred_check_branch
      %513 = sbr.rel (0) target = $region45
    $region44: #{tpu_custom_call.1} parent=1 // pred_region
      %515 = vsyncadd [#allocation4], 0
      %s517 = sshll.u32 [#allocation11], 4
      %s518 = int_to_ptr.vmem [resolvable:$true] %s517
      %s519 = sshll.u32 %s5, 4
      %s520 = int_to_ptr.hbm [resolvable:$true] %s519
      %522 = dma.vmem_to_hbm [thread:$0]  %s518, 128, %s520, [#allocation4]
    $region45: #{tpu_custom_call.1} parent=1 // pred_fallthru
      _
    // Predicated region
    $region46: #{tpu_custom_call.1} parent=1 // pred_check
      _
    $region47: #{tpu_custom_call.1} parent=1 // pred_check_branch
      %524 = sbr.rel (0) target = $region49
    $region48: #{tpu_custom_call.1} parent=1 // pred_region
      %526 = dma.done [#allocation4], 128
    $region49: #{tpu_custom_call.1} parent=1 // pred_fallthru
      _
    %527 = vsyncpa [#allocation3], 1
    %528 = vsyncpa [#allocation6], 1
    %529 = vsyncpa [#allocation9], 1
    %530 = vsyncpa [#allocation4], 1

</llo_original>
